<compile_context>
chip_gen: v7x
topology: tpu7x:2x2x1
jax: 0.10.0
libtpu: 0.0.40
codegen_flags: <defaults>
</compile_context>

<pallas_src>
import jax
import jax.numpy as jnp
from jax.experimental import pallas as pl
from jax.experimental.pallas import tpu as pltpu

LANES = 128            # TPU lane width (last dim of a vreg)
MAX_TILE_ROWS = 4096   # 4096*128*4B = 2 MiB / buffer -> safe on v5e/v6e/v7x defaults
MIN_TILE_ROWS = 8      # sublane granularity
PALLAS_MIN_N = MIN_TILE_ROWS * LANES  # below this, plain XLA beats kernel launch cost


def affine_kernel(wb_ref, x_ref, o_ref):
    # wb_ref: (1, 2) f32 in SMEM -> [w_eff, b_eff]
    # x_ref, o_ref: (tile_rows, LANES) f32 tiles in VMEM
    w = wb_ref[0, 0]
    b = wb_ref[0, 1]
    o_ref[...] = x_ref[...] * w + b  # one VPU fused multiply-add per vreg


def _pick_tile_rows(rows: int) -> int:
    # Big enough to amortize the ~0.35us fixed per-step pipeline overhead,
    # small enough to keep >=2 grid steps per TensorCore (2 TCs on v7x) and
    # stay within default scoped VMEM everywhere.
    target = max(MIN_TILE_ROWS, rows // 4)
    target = (target // MIN_TILE_ROWS) * MIN_TILE_ROWS  # multiple of 8 sublanes
    return max(MIN_TILE_ROWS, min(MAX_TILE_ROWS, target))


def mlp_forward(x, w1, b1, w2, b2):
    """Forward pass of Net.

    x:  (N, 1) f32
    w1: (1, 2) f32  (fc1.weight.T), b1: (2,) f32  (fc1.bias)
    w2: (2, 1) f32  (fc2.weight.T), b2: (1,) f32  (fc2.bias)
    Returns (N, 1) f32.
    """
    n = x.shape[0]

    # Collapse fc2(fc1(x)) into a single scalar affine (same math).
    w_eff = (w1 @ w2).astype(jnp.float32)        # (1, 1)
    b_eff = (b1 @ w2 + b2).astype(jnp.float32)   # (1,)

    # Tiny-batch fast path: a single fused XLA FMA; Pallas launch + tiling
    # overhead cannot win at this size.
    if n < PALLAS_MIN_N:
        return (x.astype(jnp.float32) * w_eff[0, 0] + b_eff[0]).reshape(n, 1)

    # Merge the two scalars into one SMEM operand.
    wb = jnp.concatenate([w_eff.reshape(1), b_eff.reshape(1)]).reshape(1, 2)

    xf = x.reshape(-1).astype(jnp.float32)
    main_n = (n // LANES) * LANES
    tail_n = n - main_n

    # Lane-dense (rows, 128) view of the main body: metadata-only, no pad copy.
    x_main = (xf if tail_n == 0 else xf[:main_n]).reshape(main_n // LANES, LANES)
    rows = main_n // LANES
    tile_rows = _pick_tile_rows(rows)
    grid = (pl.cdiv(rows, tile_rows),)  # Pallas masks the ragged last block

    out_main = pl.pallas_call(
        affine_kernel,
        out_shape=jax.ShapeDtypeStruct((rows, LANES), jnp.float32),
        grid=grid,
        in_specs=[
            pl.BlockSpec((1, 2), lambda i: (0, 0),
                         memory_space=pltpu.MemorySpace.SMEM),
            pl.BlockSpec((tile_rows, LANES), lambda i: (i, 0)),
        ],
        out_specs=pl.BlockSpec((tile_rows, LANES), lambda i: (i, 0)),
        compiler_params=pltpu.CompilerParams(
            dimension_semantics=("parallel",),  # shard the grid across both TCs on v7x
        ),
    )(wb, x_main)

    out_flat = out_main.reshape(-1)
    if tail_n:
        # <128-element ragged tail handled in plain XLA (avoids padding the
        # whole stream and a second full HBM pass).
        tail = xf[main_n:] * w_eff[0, 0] + b_eff[0]
        out_flat = jnp.concatenate([out_flat, tail])

    return out_flat.reshape(n, 1)


if __name__ == "__main__":
    key = jax.random.PRNGKey(0)
    kx, k1, k2, k3, k4, kx2 = jax.random.split(key, 6)

    # PyTorch shapes: fc1.weight (2,1), fc1.bias (2,), fc2.weight (1,2),
    # fc2.bias (1,). Stored transposed as (in, out) for row-major matmul math.
    w1 = jax.random.normal(k1, (1, 2), dtype=jnp.float32)   # fc1.weight.T
    b1 = jax.random.normal(k2, (2,), dtype=jnp.float32)     # fc1.bias
    w2 = jax.random.normal(k3, (2, 1), dtype=jnp.float32)   # fc2.weight.T
    b2 = jax.random.normal(k4, (1,), dtype=jnp.float32)     # fc2.bias

    fwd = jax.jit(mlp_forward)

    def ref_fwd(xx):
        # Same math as the PyTorch nn.Linear chain.
        return (xx @ w1 + b1[None, :]) @ w2 + b2[None, :]

    # 1) Pallas path: batch chosen so the grid has multiple steps, the last
    #    Pallas block is ragged (29 rows vs 8-row tiles) and a 37-element tail
    #    goes through the XLA tail path.
    batch = 29 * LANES + 37  # 3749
    x = jax.random.normal(kx, (batch, 1), dtype=jnp.float32)
    out = jax.block_until_ready(fwd(x, w1, b1, w2, b2))
    assert out.shape == (batch, 1)
    assert jnp.allclose(out, ref_fwd(x), atol=1e-5, rtol=1e-5)

    # 2) Tiny-batch fast path (pure XLA short-circuit).
    x_small = jax.random.normal(kx2, (8, 1), dtype=jnp.float32)
    out_small = jax.block_until_ready(fwd(x_small, w1, b1, w2, b2))
    assert out_small.shape == (8, 1)
    assert jnp.allclose(out_small, ref_fwd(x_small), atol=1e-5, rtol=1e-5)

    print("KERNEL_OK")
</pallas_src>

<mosaic_0001>
module attributes {stable_mosaic.version = 11 : i64} {
  func.func @affine_kernel(%arg0: i32, %arg1: memref<1x2xf32, #tpu.memory_space<smem>>, %arg2: memref<8x128xf32, #tpu.memory_space<vmem>>, %arg3: memref<8x128xf32, #tpu.memory_space<vmem>>) attributes {dimension_semantics = [#tpu.dimension_semantics<parallel>], iteration_bounds = array<i64: 4>, scalar_prefetch = 0 : i64, scratch_operands = 0 : i64, tpu.core_type = #tpu.core_type<tc>, window_params = [{transform_indices = @transform_0, window_bounds = array<i64: 1, 2>}, {transform_indices = @transform_1, window_bounds = array<i64: 8, 128>}, {transform_indices = @transform_2, window_bounds = array<i64: 8, 128>}]} {
    %c0 = arith.constant 0 : index
    %c0_0 = arith.constant 0 : index
    %0 = memref.load %arg1[%c0, %c0_0] : memref<1x2xf32, #tpu.memory_space<smem>>
    %c0_1 = arith.constant 0 : index
    %c1 = arith.constant 1 : index
    %1 = memref.load %arg1[%c0_1, %c1] : memref<1x2xf32, #tpu.memory_space<smem>>
    %c0_2 = arith.constant 0 : index
    %c0_3 = arith.constant 0 : index
    %2 = vector.load %arg2[%c0_2, %c0_3] : memref<8x128xf32, #tpu.memory_space<vmem>>, vector<8x128xf32>
    %3 = vector.broadcast %0 : f32 to vector<8x128xf32>
    %4 = arith.mulf %2, %3 : vector<8x128xf32>
    %5 = vector.broadcast %1 : f32 to vector<8x128xf32>
    %6 = arith.addf %4, %5 : vector<8x128xf32>
    %c0_4 = arith.constant 0 : index
    %c0_5 = arith.constant 0 : index
    %7 = vector.load %arg3[%c0_4, %c0_5] : memref<8x128xf32, #tpu.memory_space<vmem>>, vector<8x128xf32>
    tpu.vector_store %arg3[%c0_4, %c0_5], %6 {strides = array<i32>} : memref<8x128xf32, #tpu.memory_space<vmem>>, vector<8x128xf32>,
    return
  }
  func.func @transform_0(%arg0: i32) -> (i32, i32) {
    %c0_i32 = arith.constant 0 : i32
    %c0_i32_0 = arith.constant 0 : i32
    %c0_i32_1 = arith.constant 0 : i32
    return %c0_i32, %c0_i32_0 : i32, i32
  }
  func.func @transform_1(%arg0: i32) -> (i32, i32) {
    %c0_i32 = arith.constant 0 : i32
    %c0_i32_0 = arith.constant 0 : i32
    return %arg0, %c0_i32 : i32, i32
  }
  func.func @transform_2(%arg0: i32) -> (i32, i32) {
    %c0_i32 = arith.constant 0 : i32
    %c0_i32_0 = arith.constant 0 : i32
    return %arg0, %c0_i32 : i32, i32
  }
}

</mosaic_0001>

<llo_original>
// kernel: mlp_forward.1
$region0: #{mlp_forward.1}
  #allocation0 [shape = 'u32[]', space=smem, size = 0x4, offset = 0x4, fixed_abs, tag = 'smem constant byte address 0x4 - core index']
  #allocation1 [shape = 'u32[144,128]{1,0:T(1,128)}', space=vmem, size = 0x12000, scoped, tag = 'internal scratch']
  %s0 = inlined_call_operand.vmem [shape: f32[1,2], index: 0, kind: input, shape index: {}]
  %s1 = inlined_call_operand.vmem [shape: f32[29,128], index: 1, kind: input, shape index: {}]
  %s2 = inlined_call_operand.vmem [shape: f32[29,128], index: 2, kind: output, shape index: {}]
  %s3 = sld [smem:[#allocation0]]
  $region45: #{mlp_forward.1} parent=0
    _
  %s5 = ssub.s32 1, %s3
  %s6 = scalar_select 0, %s5, %s3
  $region1: #{mlp_forward.1} parent=0
    #allocation2 [shape = 'u8[512]{0}', space=smem, size = 0x200, scoped, tag = 'input window, operand 0, single buffered']
    #allocation3 [shape = 's32[2]{0}', space=sflag, size = 0x8, scoped, tag = 'scoped memory for mlp_forward.1']
    %7 = vsyncpa [#allocation3], 0
    loop: start=0, step=1, limit=6
    $region2: #{mlp_forward.1} parent=1 // loop_pre_header
      _
    $region3: #{mlp_forward.1} parent=1 // loop_header
      %s9 = sphi 0, %s13
      %p10 = scmp.ge.s32.totalorder %s9, 6
      %s17 = sphi 0, %s17
      %s19 = sphi 0, %s17
      %s20 = sphi 0, %s19
      %s34 = sphi 0, %s20
      %s40 = sphi 0, %s42
      %s43 = sphi 0, %s40
      %s44 = sphi 0, %s43
      %s60 = sphi 0, %s44
      %s66 = sphi 0, %s68
      %s69 = sphi 0, %s66
      %s70 = sphi 0, %s69
      %s86 = sphi 0, %s70
    $region4: #{mlp_forward.1} parent=1 // loop_header_branch
      %12 = sbr.rel (%p10) target = $region8
    $region5: #{mlp_forward.1} parent=1 // loop_body
      %s14 = ssub.s32 %s9, 1
      %s15 = ssub.s32 %s9, 2
      %s16 = sadd.s32 %s9, 1
      %s18 = sadd.s32 %s17, 1
      %p21 = scmp.eq.s32.totalorder %s9, 3
      %p22 = scmp.ne.s32.totalorder %s17, %s19
      %p23 = scmp.eq.s32.totalorder %s9, 0
      %p24 = por %p22, %p23
      %p25 = scmp.ne.s32.totalorder %s17, %s19
      %p26 = scmp.eq.s32.totalorder %s14, 3
      %p27 = por %p25, %p26
      %p28 = scmp.ne.s32.totalorder %s19, %s20
      %p29 = scmp.eq.s32.totalorder %s14, 0
      %p30 = por %p28, %p29
      %p31 = scmp.ne.s32.totalorder %s19, %s20
      %p32 = scmp.eq.s32.totalorder %s15, 3
      %p33 = por %p31, %p32
      %p35 = scmp.ne.s32.totalorder %s20, %s34
      %p36 = scmp.eq.s32.totalorder %s15, 0
      %p37 = por %p35, %p36
      %s38 = ssub.s32 %s9, %s16
      %p39 = scmp.eq.s32.totalorder %s38, 0
      %s41 = sadd.s32 %s40, 1
      %s42 = scalar_select %p39, %s40, %s41
      %p45 = pneg %p39
      %p46 = scmp.eq.s32.totalorder %s9, 3
      %p47 = por %p45, %p46
      %p48 = scmp.ne.s32.totalorder %s40, %s43
      %p49 = scmp.eq.s32.totalorder %s9, 0
      %p50 = por %p48, %p49
      %p51 = scmp.ne.s32.totalorder %s40, %s43
      %p52 = scmp.eq.s32.totalorder %s14, 3
      %p53 = por %p51, %p52
      %p54 = scmp.ne.s32.totalorder %s43, %s44
      %p55 = scmp.eq.s32.totalorder %s14, 0
      %p56 = por %p54, %p55
      %p57 = scmp.ne.s32.totalorder %s43, %s44
      %p58 = scmp.eq.s32.totalorder %s15, 3
      %p59 = por %p57, %p58
      %p61 = scmp.ne.s32.totalorder %s44, %s60
      %p62 = scmp.eq.s32.totalorder %s15, 0
      %p63 = por %p61, %p62
      %s64 = ssub.s32 %s9, %s16
      %p65 = scmp.eq.s32.totalorder %s64, 0
      %s67 = sadd.s32 %s66, 1
      %s68 = scalar_select %p65, %s66, %s67
      %p71 = pneg %p65
      %p72 = scmp.eq.s32.totalorder %s9, 3
      %p73 = por %p71, %p72
      %p74 = scmp.ne.s32.totalorder %s66, %s69
      %p75 = scmp.eq.s32.totalorder %s9, 0
      %p76 = por %p74, %p75
      %p77 = scmp.ne.s32.totalorder %s66, %s69
      %p78 = scmp.eq.s32.totalorder %s14, 3
      %p79 = por %p77, %p78
      %p80 = scmp.ne.s32.totalorder %s69, %s70
      %p81 = scmp.eq.s32.totalorder %s14, 0
      %p82 = por %p80, %p81
      %p83 = scmp.ne.s32.totalorder %s69, %s70
      %p84 = scmp.eq.s32.totalorder %s15, 3
      %p85 = por %p83, %p84
      %p87 = scmp.ne.s32.totalorder %s70, %s86
      %p88 = scmp.eq.s32.totalorder %s15, 0
      %p89 = por %p87, %p88
      %p90 = scmp.le.s32.totalorder 1, %s9
      %p91 = scmp.lt.s32.totalorder %s9, 5
      %p92 = pnand %p90, %p91
      %p93 = pneg %p92
      // Predicated region
      $region9: #{mlp_forward.1} parent=5 // pred_check
        _
      $region10: #{mlp_forward.1} parent=5 // pred_check_branch
        %95 = sbr.rel (%p92) target = $region12
      $region11: #{mlp_forward.1} parent=5 // pred_region
        %s96 = ssub.s32 %s9, 1
        // Predicated region
        $region13: #{mlp_forward.1} parent=11 // pred_check
          %p97 = pneg %p30
        $region14: #{mlp_forward.1} parent=11 // pred_check_branch
          %99 = sbr.rel (%p97) target = $region16
        $region15: #{mlp_forward.1} parent=11 // pred_region
          %s101 = ssub.s32 16, 16
          %102 = vsyncadd [#allocation3], %s101
          %s104 = sshll.u32 %s0, 4
          %s105 = int_to_ptr.vmem [resolvable:$true] %s104
          %107 = dma.vmem_to_smem %s105, 16, [#allocation2], [#allocation3]
        $region16: #{mlp_forward.1} parent=11 // pred_fallthru
          _
      $region12: #{mlp_forward.1} parent=5 // pred_fallthru
        _
      %p108 = scmp.lt.s32.totalorder %s9, 4
      // Predicated region
      $region17: #{mlp_forward.1} parent=5 // pred_check
        %p109 = pneg %p108
      $region18: #{mlp_forward.1} parent=5 // pred_check_branch
        %111 = sbr.rel (%p109) target = $region20
      $region19: #{mlp_forward.1} parent=5 // pred_region
        // Predicated region
        $region21: #{mlp_forward.1} parent=19 // pred_check
          %p112 = pneg %p50
        $region22: #{mlp_forward.1} parent=19 // pred_check_branch
          %114 = sbr.rel (%p112) target = $region24
        $region23: #{mlp_forward.1} parent=19 // pred_region
          %p115 = scmp.lt.s32.totalorder %s9, 3
          %s116 = scalar_select %p115, %s9, 3
          %s117 = smul.addr %s116, 8
          %s118 = scalar_lea.vmem %s1, %s117
        $region24: #{mlp_forward.1} parent=19 // pred_fallthru
          _
      $region20: #{mlp_forward.1} parent=5 // pred_fallthru
        _
      %p119 = scmp.le.s32.totalorder 1, %s9
      %p120 = scmp.lt.s32.totalorder %s9, 5
      %p121 = pnand %p119, %p120
      %p122 = pneg %p121
      // Predicated region
      $region25: #{mlp_forward.1} parent=5 // pred_check
        _
      $region26: #{mlp_forward.1} parent=5 // pred_check_branch
        %124 = sbr.rel (%p121) target = $region28
      $region27: #{mlp_forward.1} parent=5 // pred_region
        %s125 = ssub.s32 %s9, 1
        // Predicated region
        $region29: #{mlp_forward.1} parent=27 // pred_check
          %p126 = pneg %p30
        $region30: #{mlp_forward.1} parent=27 // pred_check_branch
          %128 = sbr.rel (%p126) target = $region32
        $region31: #{mlp_forward.1} parent=27 // pred_region
          %129 = dma.done [#allocation3], 16
        $region32: #{mlp_forward.1} parent=27 // pred_fallthru
          _
        %130 = sfence
        %p131 = pneg %p30
        %p132 = pneg %p27
        %p133 = scmp.lt.s32.totalorder %s14, 3
        %s134 = scalar_select %p133, %s14, 3
        %s135 = smul.addr %s134, 8
        %s136 = scalar_lea.vmem %s1, %s135
        %p137 = pneg %p56
        %p138 = pneg %p53
        %p139 = pneg %p82
        %p140 = pneg %p79
        %p141 = scmp.lt.s32.totalorder %s14, 3
        %s142 = scalar_select %p141, %s14, 3
        %s143 = smul.addr %s142, 8
        %s144 = scalar_lea.vmem %s2, %s143
        %p145 = scmp.lt.s32.totalorder %s14, 3
        %s146 = scalar_select %p145, %s14, 3
        %s147 = smul.addr %s146, 8
        %s148 = scalar_lea.vmem %s1, %s147
        %p149 = scmp.lt.s32.totalorder %s14, 3
        %s150 = scalar_select %p149, %s14, 3
        %s151 = smul.addr %s150, 8
        %s152 = scalar_lea.vmem %s2, %s151
        %s153 = sld [smem:[#allocation2]]
        %s154 = sld [smem:[#allocation2 + $0x1]]
        %v155 = vld [vmem:[%s148] sm:$0xff]
        %v156 = vstv %s153
        %v157 = vmul.f32 %v155, %v156
        %v158 = vstv %s154
        %v159 = vadd.f32 %v157, %v158
        %160 = vst [vmem:[%s152] sm:$0xff] %v159
        %p161 = scmp.lt.s32.totalorder %s14, 3
        %s162 = scalar_select %p161, %s14, 3
        %s163 = smul.addr %s162, 8
        %s164 = scalar_lea.vmem %s2, %s163
        // Predicated region
        $region33: #{mlp_forward.1} parent=27 // pred_check
          %p165 = pneg %p79
        $region34: #{mlp_forward.1} parent=27 // pred_check_branch
          %167 = sbr.rel (%p165) target = $region36
        $region35: #{mlp_forward.1} parent=27 // pred_region
          _
        $region36: #{mlp_forward.1} parent=27 // pred_fallthru
          _
      $region28: #{mlp_forward.1} parent=5 // pred_fallthru
        _
      %p168 = scmp.le.s32.totalorder 2, %s9
      // Predicated region
      $region37: #{mlp_forward.1} parent=5 // pred_check
        %p169 = pneg %p168
      $region38: #{mlp_forward.1} parent=5 // pred_check_branch
        %171 = sbr.rel (%p169) target = $region40
      $region39: #{mlp_forward.1} parent=5 // pred_region
        %s172 = ssub.s32 %s9, 2
        // Predicated region
        $region41: #{mlp_forward.1} parent=39 // pred_check
          %p173 = pneg %p85
        $region42: #{mlp_forward.1} parent=39 // pred_check_branch
          %175 = sbr.rel (%p173) target = $region44
        $region43: #{mlp_forward.1} parent=39 // pred_region
          %p176 = scmp.lt.s32.totalorder %s15, 3
          %s177 = scalar_select %p176, %s15, 3
          %s178 = smul.addr %s177, 8
          %s179 = scalar_lea.vmem %s2, %s178
        $region44: #{mlp_forward.1} parent=39 // pred_fallthru
          _
      $region40: #{mlp_forward.1} parent=5 // pred_fallthru
        _
    $region6: #{mlp_forward.1} parent=1 // loop_footer
      %s13 = sadd.s32 1, %s9
    $region7: #{mlp_forward.1} parent=1 // loop_footer_branch
      %8 = sbr.rel target = $region3
    $region8: #{mlp_forward.1} parent=1 // loop_exit
      _
    %180 = vsyncpa [#allocation3], 1
    %s181 = scalar_lea.sflag [#allocation3], 1
    %182 = vsyncpa %s181, 1

</llo_original>
